<compile_context>
chip_gen: v5e
topology: v5e:2x2
jax: 0.10.0
libtpu: 0.0.40
codegen_flags: <defaults>
</compile_context>

<pallas_src>
import functools

import jax
import jax.numpy as jnp
from jax.experimental import pallas as pl
from jax.experimental.pallas import tpu as pltpu

MAX_BLOCK_ROWS = 256  # rows of output per grid step (multiple of 8)


def _round_up(x, m):
    return ((x + m - 1) // m) * m


def _onehot_gather_kernel(ids_ref, w_ref, o_ref):
    # ids_ref: VMEM int32[R, 1]   current block of (already offset) ids
    # w_ref:   VMEM f32[V, D]     combined (user ++ item) table, resident
    # o_ref:   VMEM f32[R, D]     current output block (lane-dense, D >= 128)
    R = o_ref.shape[0]
    V = w_ref.shape[0]
    ids = ids_ref[...]                                        # (R, 1)
    col = jax.lax.broadcasted_iota(jnp.int32, (R, V), 1)      # (R, V)
    onehot = (ids == col).astype(w_ref.dtype)                 # row selector
    # Single MXU pass selects the rows; one unmasked full-block store.
    o_ref[...] = jnp.dot(
        onehot,
        w_ref[...],
        preferred_element_type=jnp.float32,
        precision=jax.lax.Precision.HIGHEST,
    ).astype(o_ref.dtype)


def _fused_lookup_call(weight, ids_2d, rows_per_step):
    V, D = weight.shape
    n_pad = ids_2d.shape[0]
    grid = (n_pad // rows_per_step,)
    return pl.pallas_call(
        _onehot_gather_kernel,
        out_shape=jax.ShapeDtypeStruct((n_pad, D), weight.dtype),
        grid_spec=pltpu.PrefetchScalarGridSpec(
            num_scalar_prefetch=0,
            grid=grid,
            in_specs=[
                # id column block for this step
                pl.BlockSpec((rows_per_step, 1), lambda i: (i, 0)),
                # whole combined table; constant index_map -> DMA'd once and
                # kept resident across all grid steps
                pl.BlockSpec((V, D), lambda i: (0, 0)),
            ],
            out_specs=pl.BlockSpec((rows_per_step, D), lambda i: (i, 0)),
        ),
        compiler_params=pltpu.CompilerParams(
            # output blocks are fully independent -> safe to shard across
            # TensorCores on v7x, neutral on single-TC v5e/v6e
            dimension_semantics=("parallel",),
            vmem_limit_bytes=32 * 1024 * 1024,
        ),
    )(ids_2d, weight)


@functools.partial(jax.jit, static_argnames=("item_offset",))
def _partitioned_embedding_forward(combined_weight, user_ids, item_ids,
                                   ne_item_ids, *, item_offset):
    D = combined_weight.shape[1]
    u = user_ids.reshape(-1).astype(jnp.int32)
    it = item_ids.reshape(-1).astype(jnp.int32) + item_offset
    ne = ne_item_ids.reshape(-1).astype(jnp.int32) + item_offset
    flat = jnp.concatenate([u, it, ne])

    n_u, n_i, n_ne = u.shape[0], it.shape[0], ne.shape[0]
    n = flat.shape[0]

    # Block sizing: one big block if everything fits, otherwise 256-row steps.
    if n <= MAX_BLOCK_ROWS:
        n_pad = _round_up(n, 8)
        rows = n_pad
    else:
        n_pad = _round_up(n, MAX_BLOCK_ROWS)
        rows = MAX_BLOCK_ROWS
    if n_pad != n:
        flat = jnp.pad(flat, (0, n_pad - n))
    ids_2d = flat.reshape(n_pad, 1)

    out = _fused_lookup_call(combined_weight, ids_2d, rows)

    user_out = out[:n_u].reshape(*user_ids.shape, D)
    item_out = out[n_u:n_u + n_i].reshape(*item_ids.shape, D)
    ne_item_out = out[n_u + n_i:n_u + n_i + n_ne].reshape(*ne_item_ids.shape, D)
    return user_out, item_out, ne_item_out


def xavier_normal(key, num_embeddings, embedding_dim):
    # torch.nn.init.xavier_normal_ on a (num_embeddings, embedding_dim) tensor:
    # fan_out = num_embeddings, fan_in = embedding_dim, gain = 1.
    std = (2.0 / (num_embeddings + embedding_dim)) ** 0.5
    return std * jax.random.normal(key, (num_embeddings, embedding_dim),
                                   dtype=jnp.float32)


class PartitionedEmbeddingPallas:
    """world_size == 1 partition: full tables live on this 'rank'."""

    def __init__(self, num_user_embeddings, num_item_embeddings,
                 embedding_dim, key):
        ku, ki = jax.random.split(key)
        self.embedding_dim = embedding_dim
        self.user_weight = xavier_normal(ku, num_user_embeddings, embedding_dim)
        self.item_weight = xavier_normal(ki, num_item_embeddings, embedding_dim)
        # Stack both tables once so all three lookups share a single kernel
        # launch and a single table DMA; item rows live at offset num_user.
        self.combined_weight = jnp.concatenate(
            [self.user_weight, self.item_weight], axis=0)
        self.item_offset = int(num_user_embeddings)

    def forward(self, user_ids, item_ids, ne_item_ids):
        return _partitioned_embedding_forward(
            self.combined_weight, user_ids, item_ids, ne_item_ids,
            item_offset=self.item_offset)


if __name__ == "__main__":
    key = jax.random.PRNGKey(0)
    k_w, k_u, k_i, k_n = jax.random.split(key, 4)

    num_user_embeddings = 64
    num_item_embeddings = 64
    embedding_dim = 128      # lane-dense embedding width
    batch = 8
    num_neg_sample = 2

    module = PartitionedEmbeddingPallas(num_user_embeddings,
                                        num_item_embeddings,
                                        embedding_dim, k_w)

    user_ids = jax.random.randint(k_u, (batch,), 0, num_user_embeddings,
                                  dtype=jnp.int32)
    item_ids = jax.random.randint(k_i, (batch,), 0, num_item_embeddings,
                                  dtype=jnp.int32)
    ne_item_ids = jax.random.randint(k_n, (num_neg_sample, batch), 0,
                                     num_item_embeddings, dtype=jnp.int32)

    user_out, item_out, ne_item_out = module.forward(user_ids, item_ids,
                                                     ne_item_ids)
    jax.block_until_ready((user_out, item_out, ne_item_out))

    # correctness check against plain-JAX gather
    assert user_out.shape == (batch, embedding_dim)
    assert item_out.shape == (batch, embedding_dim)
    assert ne_item_out.shape == (num_neg_sample, batch, embedding_dim)
    assert jnp.allclose(user_out, module.user_weight[user_ids],
                        atol=1e-5, rtol=1e-5)
    assert jnp.allclose(item_out, module.item_weight[item_ids],
                        atol=1e-5, rtol=1e-5)
    assert jnp.allclose(ne_item_out, module.item_weight[ne_item_ids],
                        atol=1e-5, rtol=1e-5)

    print("KERNEL_OK")
</pallas_src>

<mosaic_0001>
module attributes {stable_mosaic.version = 11 : i64} {
  func.func @_onehot_gather_kernel(%arg0: i32, %arg1: memref<32x1xi32, #tpu.memory_space<vmem>>, %arg2: memref<128x128xf32, #tpu.memory_space<vmem>>, %arg3: memref<32x128xf32, #tpu.memory_space<vmem>>) attributes {dimension_semantics = [#tpu.dimension_semantics<parallel>], iteration_bounds = array<i64: 1>, scalar_prefetch = 0 : i64, scratch_operands = 0 : i64, tpu.core_type = #tpu.core_type<tc>, window_params = [{transform_indices = @transform_0, window_bounds = array<i64: 32, 1>}, {pipeline_mode = #tpu.pipeline_mode<synchronous>, transform_indices = @transform_1, window_bounds = array<i64: 128, 128>}, {transform_indices = @transform_2, window_bounds = array<i64: 32, 128>}]} {
    %c0 = arith.constant 0 : index
    %c0_0 = arith.constant 0 : index
    %0 = vector.load %arg1[%c0, %c0_0] : memref<32x1xi32, #tpu.memory_space<vmem>>, vector<32x1xi32>
    %1 = tpu.iota {dimensions = array<i32: 1>} : vector<32x128xi32>
    %2 = vector.broadcast %0 : vector<32x1xi32> to vector<32x128xi32>
    %3 = arith.cmpi eq, %2, %1 : vector<32x128xi32>
    %4 = arith.extui %3 : vector<32x128xi1> to vector<32x128xi32>
    %5 = arith.sitofp %4 : vector<32x128xi32> to vector<32x128xf32>
    %c0_1 = arith.constant 0 : index
    %c0_2 = arith.constant 0 : index
    %6 = vector.load %arg2[%c0_1, %c0_2] : memref<128x128xf32, #tpu.memory_space<vmem>>, vector<128x128xf32>
    %cst = arith.constant dense<0.000000e+00> : vector<32x128xf32>
    %7 = tpu.matmul %5, %6, %cst {dimension_numbers = #tpu.dot_dimension_numbers<[1], [0], [0], [1], [0, 0, 1, 1], [], []>, precision = #tpu.contract_precision<fp32>} : vector<32x128xf32>, vector<128x128xf32>, vector<32x128xf32> -> vector<32x128xf32>
    %c0_3 = arith.constant 0 : index
    %c0_4 = arith.constant 0 : index
    %8 = vector.load %arg3[%c0_3, %c0_4] : memref<32x128xf32, #tpu.memory_space<vmem>>, vector<32x128xf32>
    tpu.vector_store %arg3[%c0_3, %c0_4], %7 {strides = array<i32>} : memref<32x128xf32, #tpu.memory_space<vmem>>, vector<32x128xf32>,
    return
  }
  func.func @transform_0(%arg0: i32) -> (i32, i32) {
    %c0_i32 = arith.constant 0 : i32
    %c0_i32_0 = arith.constant 0 : i32
    return %arg0, %c0_i32 : i32, i32
  }
  func.func @transform_1(%arg0: i32) -> (i32, i32) {
    %c0_i32 = arith.constant 0 : i32
    %c0_i32_0 = arith.constant 0 : i32
    %c0_i32_1 = arith.constant 0 : i32
    return %c0_i32, %c0_i32_0 : i32, i32
  }
  func.func @transform_2(%arg0: i32) -> (i32, i32) {
    %c0_i32 = arith.constant 0 : i32
    %c0_i32_0 = arith.constant 0 : i32
    return %arg0, %c0_i32 : i32, i32
  }
}

</mosaic_0001>

<llo_original>
// kernel: _partitioned_embedding_forward.1
$region0: #{_partitioned_embedding_forward.1}
  #allocation0 [shape = 'u32[]', space=smem, size = 0x4, offset = 0x4, fixed_abs, tag = 'smem constant byte address 0x4 - core index']
  #allocation1 [shape = 'u32[72,128]{1,0:T(1,128)}', space=vmem, size = 0x9000, scoped, tag = 'internal scratch']
  %s0 = inlined_call_operand.vmem [shape: s32[32,1], index: 0, kind: input, shape index: {}]
  %s1 = inlined_call_operand.hbm [shape: f32[128,128], index: 1, kind: input, shape index: {}]
  %s2 = inlined_call_operand.vmem [shape: f32[32,128], index: 2, kind: output, shape index: {}]
  %s3 = sld [smem:[#allocation0]]
  $region22: #{_partitioned_embedding_forward.1} parent=0
    _
  %s5 = ssub.s32 1, %s3
  %s6 = scalar_select 0, %s5, %s3
  $region1: #{_partitioned_embedding_forward.1} parent=0
    #allocation2 [shape = 'u8[65536]{0}', space=vmem, size = 0x10000, scoped, tag = 'input window, operand 1, single buffered']
    #allocation3 [shape = 's32[1]{0}', space=sflag, size = 0x4, scoped, tag = 'scoped memory for _partitioned_embedding_forward.1']
    %7 = vsyncpa [#allocation3], 0
    // Predicated region
    $region2: #{_partitioned_embedding_forward.1} parent=1 // pred_check
      _
    $region3: #{_partitioned_embedding_forward.1} parent=1 // pred_check_branch
      %9 = sbr.rel (0) target = $region5
    $region4: #{_partitioned_embedding_forward.1} parent=1 // pred_region
      _
    $region5: #{_partitioned_embedding_forward.1} parent=1 // pred_fallthru
      _
    // Predicated region
    $region6: #{_partitioned_embedding_forward.1} parent=1 // pred_check
      _
    $region7: #{_partitioned_embedding_forward.1} parent=1 // pred_check_branch
      %11 = sbr.rel (0) target = $region9
    $region8: #{_partitioned_embedding_forward.1} parent=1 // pred_region
      %13 = vsyncadd [#allocation3], 0
      %s14 = sshll.u32 %s1, 4
      %s15 = int_to_ptr.hbm [resolvable:$true] %s14
      %s16 = sshll.u32 [#allocation2], 4
      %s17 = int_to_ptr.vmem [resolvable:$true] %s16
      %22 = dma.hbm_to_vmem [thread:$0]  %s15, 2048, %s17, [#allocation3], 128, 128, 8
    $region9: #{_partitioned_embedding_forward.1} parent=1 // pred_fallthru
      _
    // Predicated region
    $region10: #{_partitioned_embedding_forward.1} parent=1 // pred_check
      _
    $region11: #{_partitioned_embedding_forward.1} parent=1 // pred_check_branch
      %24 = sbr.rel (0) target = $region13
    $region12: #{_partitioned_embedding_forward.1} parent=1 // pred_region
      %26 = dma.done [#allocation3], 2048
    $region13: #{_partitioned_embedding_forward.1} parent=1 // pred_fallthru
      _
    %v27 = vld [vmem:[%s0] sm:$0xff]
    %v28 = vld [vmem:[%s0 + $0x8] sm:$0xff]
    %v29 = vld [vmem:[%s0 + $0x10] sm:$0xff]
    %v30 = vld [vmem:[%s0 + $0x18] sm:$0xff]
    %v31 = vlaneseq
    %v32 = vand.u32 %v31, 127
    %33 = vset.pattern.permute.xlu0 0
    %34 = vperm.xlu0 %33, %v27
    %v35 = vpop.permute.xlu0 %34
    %36 = vset.pattern.permute.xlu0 0
    %37 = vperm.xlu0 %36, %v28
    %v38 = vpop.permute.xlu0 %37
    %39 = vset.pattern.permute.xlu0 0
    %40 = vperm.xlu0 %39, %v29
    %v41 = vpop.permute.xlu0 %40
    %42 = vset.pattern.permute.xlu0 0
    %43 = vperm.xlu0 %42, %v30
    %v44 = vpop.permute.xlu0 %43
    %vm45 = vcmp.eq.s32.totalorder %v35, %v32
    %vm46 = vcmp.eq.s32.totalorder %v38, %v32
    %vm47 = vcmp.eq.s32.totalorder %v41, %v32
    %vm48 = vcmp.eq.s32.totalorder %v44, %v32
    %v49 = vsel %vm45, 1, 0
    %v50 = vsel %vm46, 1, 0
    %v51 = vsel %vm47, 1, 0
    %v52 = vsel %vm48, 1, 0
    %v53 = vcvt.s32.f32 %v49
    %v54 = vcvt.s32.f32 %v50
    %v55 = vcvt.s32.f32 %v51
    %v56 = vcvt.s32.f32 %v52
    %v57 = vld [vmem:[#allocation2] sm:$0xff]
    %v58 = vld [vmem:[#allocation2 + $0x8] sm:$0xff]
    %v59 = vld [vmem:[#allocation2 + $0x10] sm:$0xff]
    %v60 = vld [vmem:[#allocation2 + $0x18] sm:$0xff]
    %v61 = vld [vmem:[#allocation2 + $0x20] sm:$0xff]
    %v62 = vld [vmem:[#allocation2 + $0x28] sm:$0xff]
    %v63 = vld [vmem:[#allocation2 + $0x30] sm:$0xff]
    %v64 = vld [vmem:[#allocation2 + $0x38] sm:$0xff]
    %v65 = vld [vmem:[#allocation2 + $0x40] sm:$0xff]
    %v66 = vld [vmem:[#allocation2 + $0x48] sm:$0xff]
    %v67 = vld [vmem:[#allocation2 + $0x50] sm:$0xff]
    %v68 = vld [vmem:[#allocation2 + $0x58] sm:$0xff]
    %v69 = vld [vmem:[#allocation2 + $0x60] sm:$0xff]
    %v70 = vld [vmem:[#allocation2 + $0x68] sm:$0xff]
    %v71 = vld [vmem:[#allocation2 + $0x70] sm:$0xff]
    %v72 = vld [vmem:[#allocation2 + $0x78] sm:$0xff]
    %v73 = vand.u32 %v72, 4294901760
    %74 = vmatpush.msra.mxu0 %v73
    %v75 = vand.u32 %v71, 4294901760
    %76 = vmatpush.msra.mxu0 %v75
    %v77 = vand.u32 %v70, 4294901760
    %78 = vmatpush.msra.mxu0 %v77
    %v79 = vand.u32 %v69, 4294901760
    %80 = vmatpush.msra.mxu0 %v79
    %v81 = vand.u32 %v68, 4294901760
    %82 = vmatpush.msra.mxu0 %v81
    %v83 = vand.u32 %v67, 4294901760
    %84 = vmatpush.msra.mxu0 %v83
    %v85 = vand.u32 %v66, 4294901760
    %86 = vmatpush.msra.mxu0 %v85
    %v87 = vand.u32 %v65, 4294901760
    %88 = vmatpush.msra.mxu0 %v87
    %v89 = vand.u32 %v64, 4294901760
    %90 = vmatpush.msra.mxu0 %v89
    %v91 = vand.u32 %v63, 4294901760
    %92 = vmatpush.msra.mxu0 %v91
    %v93 = vand.u32 %v62, 4294901760
    %94 = vmatpush.msra.mxu0 %v93
    %v95 = vand.u32 %v61, 4294901760
    %96 = vmatpush.msra.mxu0 %v95
    %v97 = vand.u32 %v60, 4294901760
    %98 = vmatpush.msra.mxu0 %v97
    %v99 = vand.u32 %v59, 4294901760
    %100 = vmatpush.msra.mxu0 %v99
    %v101 = vand.u32 %v58, 4294901760
    %102 = vmatpush.msra.mxu0 %v101
    %v103 = vand.u32 %v57, 4294901760
    %104 = vmatpush.msra.mxu0 %v103
    %v105 = vand.u32 %v53, 4294901760
    %v106 = vsub.f32 %v53, %v105
    %v107 = vand.u32 %v106, 4294901760
    %v108 = vsub.f32 %v106, %v107
    %v109 = vand.u32 %v108, 4294901760
    %110 = vmatmul.f32.gmra.mxu0 %v109
    %v111 = vpop.f32.mrf.mxu0
    %v112 = vadd.f32 0.0, %v111
    %v113 = vand.u32 %v54, 4294901760
    %v114 = vsub.f32 %v54, %v113
    %v115 = vand.u32 %v114, 4294901760
    %v116 = vsub.f32 %v114, %v115
    %v117 = vand.u32 %v116, 4294901760
    %118 = vmatmul.f32.gmra.mxu0 %v117
    %v119 = vpop.f32.mrf.mxu0
    %v120 = vadd.f32 0.0, %v119
    %v121 = vand.u32 %v55, 4294901760
    %v122 = vsub.f32 %v55, %v121
    %v123 = vand.u32 %v122, 4294901760
    %v124 = vsub.f32 %v122, %v123
    %v125 = vand.u32 %v124, 4294901760
    %126 = vmatmul.f32.gmra.mxu0 %v125
    %v127 = vpop.f32.mrf.mxu0
    %v128 = vadd.f32 0.0, %v127
    %v129 = vand.u32 %v56, 4294901760
    %v130 = vsub.f32 %v56, %v129
    %v131 = vand.u32 %v130, 4294901760
    %v132 = vsub.f32 %v130, %v131
    %v133 = vand.u32 %v132, 4294901760
    %134 = vmatmul.f32.gmra.mxu0 %v133
    %v135 = vpop.f32.mrf.mxu0
    %v136 = vadd.f32 0.0, %v135
    %137 = vdwg.mxu0
    %v138 = vand.u32 %v72, 4294901760
    %v139 = vsub.f32 %v72, %v138
    %v140 = vand.u32 %v139, 4294901760
    %v141 = vsub.f32 %v139, %v140
    %v142 = vand.u32 %v141, 4294901760
    %143 = vmatpush.msra.mxu0 %v142
    %v144 = vand.u32 %v71, 4294901760
    %v145 = vsub.f32 %v71, %v144
    %v146 = vand.u32 %v145, 4294901760
    %v147 = vsub.f32 %v145, %v146
    %v148 = vand.u32 %v147, 4294901760
    %149 = vmatpush.msra.mxu0 %v148
    %v150 = vand.u32 %v70, 4294901760
    %v151 = vsub.f32 %v70, %v150
    %v152 = vand.u32 %v151, 4294901760
    %v153 = vsub.f32 %v151, %v152
    %v154 = vand.u32 %v153, 4294901760
    %155 = vmatpush.msra.mxu0 %v154
    %v156 = vand.u32 %v69, 4294901760
    %v157 = vsub.f32 %v69, %v156
    %v158 = vand.u32 %v157, 4294901760
    %v159 = vsub.f32 %v157, %v158
    %v160 = vand.u32 %v159, 4294901760
    %161 = vmatpush.msra.mxu0 %v160
    %v162 = vand.u32 %v68, 4294901760
    %v163 = vsub.f32 %v68, %v162
    %v164 = vand.u32 %v163, 4294901760
    %v165 = vsub.f32 %v163, %v164
    %v166 = vand.u32 %v165, 4294901760
    %167 = vmatpush.msra.mxu0 %v166
    %v168 = vand.u32 %v67, 4294901760
    %v169 = vsub.f32 %v67, %v168
    %v170 = vand.u32 %v169, 4294901760
    %v171 = vsub.f32 %v169, %v170
    %v172 = vand.u32 %v171, 4294901760
    %173 = vmatpush.msra.mxu0 %v172
    %v174 = vand.u32 %v66, 4294901760
    %v175 = vsub.f32 %v66, %v174
    %v176 = vand.u32 %v175, 4294901760
    %v177 = vsub.f32 %v175, %v176
    %v178 = vand.u32 %v177, 4294901760
    %179 = vmatpush.msra.mxu0 %v178
    %v180 = vand.u32 %v65, 4294901760
    %v181 = vsub.f32 %v65, %v180
    %v182 = vand.u32 %v181, 4294901760
    %v183 = vsub.f32 %v181, %v182
    %v184 = vand.u32 %v183, 4294901760
    %185 = vmatpush.msra.mxu0 %v184
    %v186 = vand.u32 %v64, 4294901760
    %v187 = vsub.f32 %v64, %v186
    %v188 = vand.u32 %v187, 4294901760
    %v189 = vsub.f32 %v187, %v188
    %v190 = vand.u32 %v189, 4294901760
    %191 = vmatpush.msra.mxu0 %v190
    %v192 = vand.u32 %v63, 4294901760
    %v193 = vsub.f32 %v63, %v192
    %v194 = vand.u32 %v193, 4294901760
    %v195 = vsub.f32 %v193, %v194
    %v196 = vand.u32 %v195, 4294901760
    %197 = vmatpush.msra.mxu0 %v196
    %v198 = vand.u32 %v62, 4294901760
    %v199 = vsub.f32 %v62, %v198
    %v200 = vand.u32 %v199, 4294901760
    %v201 = vsub.f32 %v199, %v200
    %v202 = vand.u32 %v201, 4294901760
    %203 = vmatpush.msra.mxu0 %v202
    %v204 = vand.u32 %v61, 4294901760
    %v205 = vsub.f32 %v61, %v204
    %v206 = vand.u32 %v205, 4294901760
    %v207 = vsub.f32 %v205, %v206
    %v208 = vand.u32 %v207, 4294901760
    %209 = vmatpush.msra.mxu0 %v208
    %v210 = vand.u32 %v60, 4294901760
    %v211 = vsub.f32 %v60, %v210
    %v212 = vand.u32 %v211, 4294901760
    %v213 = vsub.f32 %v211, %v212
    %v214 = vand.u32 %v213, 4294901760
    %215 = vmatpush.msra.mxu0 %v214
    %v216 = vand.u32 %v59, 4294901760
    %v217 = vsub.f32 %v59, %v216
    %v218 = vand.u32 %v217, 4294901760
    %v219 = vsub.f32 %v217, %v218
    %v220 = vand.u32 %v219, 4294901760
    %221 = vmatpush.msra.mxu0 %v220
    %v222 = vand.u32 %v58, 4294901760
    %v223 = vsub.f32 %v58, %v222
    %v224 = vand.u32 %v223, 4294901760
    %v225 = vsub.f32 %v223, %v224
    %v226 = vand.u32 %v225, 4294901760
    %227 = vmatpush.msra.mxu0 %v226
    %v228 = vand.u32 %v57, 4294901760
    %v229 = vsub.f32 %v57, %v228
    %v230 = vand.u32 %v229, 4294901760
    %v231 = vsub.f32 %v229, %v230
    %v232 = vand.u32 %v231, 4294901760
    %233 = vmatpush.msra.mxu0 %v232
    %v234 = vand.u32 %v53, 4294901760
    %235 = vmatmul.f32.gmra.mxu0 %v234
    %v236 = vpop.f32.mrf.mxu0
    %v237 = vadd.f32 %v112, %v236
    %v238 = vand.u32 %v54, 4294901760
    %239 = vmatmul.f32.gmra.mxu0 %v238
    %v240 = vpop.f32.mrf.mxu0
    %v241 = vadd.f32 %v120, %v240
    %v242 = vand.u32 %v55, 4294901760
    %243 = vmatmul.f32.gmra.mxu0 %v242
    %v244 = vpop.f32.mrf.mxu0
    %v245 = vadd.f32 %v128, %v244
    %v246 = vand.u32 %v56, 4294901760
    %247 = vmatmul.f32.gmra.mxu0 %v246
    %v248 = vpop.f32.mrf.mxu0
    %v249 = vadd.f32 %v136, %v248
    %250 = vdwg.mxu0
    %v251 = vand.u32 %v72, 4294901760
    %v252 = vsub.f32 %v72, %v251
    %253 = vmatpush.msra.mxu0 %v252
    %v254 = vand.u32 %v71, 4294901760
    %v255 = vsub.f32 %v71, %v254
    %256 = vmatpush.msra.mxu0 %v255
    %v257 = vand.u32 %v70, 4294901760
    %v258 = vsub.f32 %v70, %v257
    %259 = vmatpush.msra.mxu0 %v258
    %v260 = vand.u32 %v69, 4294901760
    %v261 = vsub.f32 %v69, %v260
    %262 = vmatpush.msra.mxu0 %v261
    %v263 = vand.u32 %v68, 4294901760
    %v264 = vsub.f32 %v68, %v263
    %265 = vmatpush.msra.mxu0 %v264
    %v266 = vand.u32 %v67, 4294901760
    %v267 = vsub.f32 %v67, %v266
    %268 = vmatpush.msra.mxu0 %v267
    %v269 = vand.u32 %v66, 4294901760
    %v270 = vsub.f32 %v66, %v269
    %271 = vmatpush.msra.mxu0 %v270
    %v272 = vand.u32 %v65, 4294901760
    %v273 = vsub.f32 %v65, %v272
    %274 = vmatpush.msra.mxu0 %v273
    %v275 = vand.u32 %v64, 4294901760
    %v276 = vsub.f32 %v64, %v275
    %277 = vmatpush.msra.mxu0 %v276
    %v278 = vand.u32 %v63, 4294901760
    %v279 = vsub.f32 %v63, %v278
    %280 = vmatpush.msra.mxu0 %v279
    %v281 = vand.u32 %v62, 4294901760
    %v282 = vsub.f32 %v62, %v281
    %283 = vmatpush.msra.mxu0 %v282
    %v284 = vand.u32 %v61, 4294901760
    %v285 = vsub.f32 %v61, %v284
    %286 = vmatpush.msra.mxu0 %v285
    %v287 = vand.u32 %v60, 4294901760
    %v288 = vsub.f32 %v60, %v287
    %289 = vmatpush.msra.mxu0 %v288
    %v290 = vand.u32 %v59, 4294901760
    %v291 = vsub.f32 %v59, %v290
    %292 = vmatpush.msra.mxu0 %v291
    %v293 = vand.u32 %v58, 4294901760
    %v294 = vsub.f32 %v58, %v293
    %295 = vmatpush.msra.mxu0 %v294
    %v296 = vand.u32 %v57, 4294901760
    %v297 = vsub.f32 %v57, %v296
    %298 = vmatpush.msra.mxu0 %v297
    %v299 = vand.u32 %v53, 4294901760
    %v300 = vsub.f32 %v53, %v299
    %301 = vmatmul.f32.gmra.mxu0 %v300
    %v302 = vpop.f32.mrf.mxu0
    %v303 = vadd.f32 %v237, %v302
    %v304 = vand.u32 %v54, 4294901760
    %v305 = vsub.f32 %v54, %v304
    %306 = vmatmul.f32.gmra.mxu0 %v305
    %v307 = vpop.f32.mrf.mxu0
    %v308 = vadd.f32 %v241, %v307
    %v309 = vand.u32 %v55, 4294901760
    %v310 = vsub.f32 %v55, %v309
    %311 = vmatmul.f32.gmra.mxu0 %v310
    %v312 = vpop.f32.mrf.mxu0
    %v313 = vadd.f32 %v245, %v312
    %v314 = vand.u32 %v56, 4294901760
    %v315 = vsub.f32 %v56, %v314
    %316 = vmatmul.f32.gmra.mxu0 %v315
    %v317 = vpop.f32.mrf.mxu0
    %v318 = vadd.f32 %v249, %v317
    %319 = vdwg.mxu0
    %v320 = vand.u32 %v72, 4294901760
    %321 = vmatpush.msra.mxu0 %v320
    %v322 = vand.u32 %v71, 4294901760
    %323 = vmatpush.msra.mxu0 %v322
    %v324 = vand.u32 %v70, 4294901760
    %325 = vmatpush.msra.mxu0 %v324
    %v326 = vand.u32 %v69, 4294901760
    %327 = vmatpush.msra.mxu0 %v326
    %v328 = vand.u32 %v68, 4294901760
    %329 = vmatpush.msra.mxu0 %v328
    %v330 = vand.u32 %v67, 4294901760
    %331 = vmatpush.msra.mxu0 %v330
    %v332 = vand.u32 %v66, 4294901760
    %333 = vmatpush.msra.mxu0 %v332
    %v334 = vand.u32 %v65, 4294901760
    %335 = vmatpush.msra.mxu0 %v334
    %v336 = vand.u32 %v64, 4294901760
    %337 = vmatpush.msra.mxu0 %v336
    %v338 = vand.u32 %v63, 4294901760
    %339 = vmatpush.msra.mxu0 %v338
    %v340 = vand.u32 %v62, 4294901760
    %341 = vmatpush.msra.mxu0 %v340
    %v342 = vand.u32 %v61, 4294901760
    %343 = vmatpush.msra.mxu0 %v342
    %v344 = vand.u32 %v60, 4294901760
    %345 = vmatpush.msra.mxu0 %v344
    %v346 = vand.u32 %v59, 4294901760
    %347 = vmatpush.msra.mxu0 %v346
    %v348 = vand.u32 %v58, 4294901760
    %349 = vmatpush.msra.mxu0 %v348
    %v350 = vand.u32 %v57, 4294901760
    %351 = vmatpush.msra.mxu0 %v350
    %v352 = vand.u32 %v53, 4294901760
    %v353 = vsub.f32 %v53, %v352
    %v354 = vand.u32 %v353, 4294901760
    %355 = vmatmul.f32.gmra.mxu0 %v354
    %v356 = vpop.f32.mrf.mxu0
    %v357 = vadd.f32 %v303, %v356
    %v358 = vand.u32 %v54, 4294901760
    %v359 = vsub.f32 %v54, %v358
    %v360 = vand.u32 %v359, 4294901760
    %361 = vmatmul.f32.gmra.mxu0 %v360
    %v362 = vpop.f32.mrf.mxu0
    %v363 = vadd.f32 %v308, %v362
    %v364 = vand.u32 %v55, 4294901760
    %v365 = vsub.f32 %v55, %v364
    %v366 = vand.u32 %v365, 4294901760
    %367 = vmatmul.f32.gmra.mxu0 %v366
    %v368 = vpop.f32.mrf.mxu0
    %v369 = vadd.f32 %v313, %v368
    %v370 = vand.u32 %v56, 4294901760
    %v371 = vsub.f32 %v56, %v370
    %v372 = vand.u32 %v371, 4294901760
    %373 = vmatmul.f32.gmra.mxu0 %v372
    %v374 = vpop.f32.mrf.mxu0
    %v375 = vadd.f32 %v318, %v374
    %376 = vdwg.mxu0
    %v377 = vand.u32 %v72, 4294901760
    %v378 = vsub.f32 %v72, %v377
    %v379 = vand.u32 %v378, 4294901760
    %380 = vmatpush.msra.mxu0 %v379
    %v381 = vand.u32 %v71, 4294901760
    %v382 = vsub.f32 %v71, %v381
    %v383 = vand.u32 %v382, 4294901760
    %384 = vmatpush.msra.mxu0 %v383
    %v385 = vand.u32 %v70, 4294901760
    %v386 = vsub.f32 %v70, %v385
    %v387 = vand.u32 %v386, 4294901760
    %388 = vmatpush.msra.mxu0 %v387
    %v389 = vand.u32 %v69, 4294901760
    %v390 = vsub.f32 %v69, %v389
    %v391 = vand.u32 %v390, 4294901760
    %392 = vmatpush.msra.mxu0 %v391
    %v393 = vand.u32 %v68, 4294901760
    %v394 = vsub.f32 %v68, %v393
    %v395 = vand.u32 %v394, 4294901760
    %396 = vmatpush.msra.mxu0 %v395
    %v397 = vand.u32 %v67, 4294901760
    %v398 = vsub.f32 %v67, %v397
    %v399 = vand.u32 %v398, 4294901760
    %400 = vmatpush.msra.mxu0 %v399
    %v401 = vand.u32 %v66, 4294901760
    %v402 = vsub.f32 %v66, %v401
    %v403 = vand.u32 %v402, 4294901760
    %404 = vmatpush.msra.mxu0 %v403
    %v405 = vand.u32 %v65, 4294901760
    %v406 = vsub.f32 %v65, %v405
    %v407 = vand.u32 %v406, 4294901760
    %408 = vmatpush.msra.mxu0 %v407
    %v409 = vand.u32 %v64, 4294901760
    %v410 = vsub.f32 %v64, %v409
    %v411 = vand.u32 %v410, 4294901760
    %412 = vmatpush.msra.mxu0 %v411
    %v413 = vand.u32 %v63, 4294901760
    %v414 = vsub.f32 %v63, %v413
    %v415 = vand.u32 %v414, 4294901760
    %416 = vmatpush.msra.mxu0 %v415
    %v417 = vand.u32 %v62, 4294901760
    %v418 = vsub.f32 %v62, %v417
    %v419 = vand.u32 %v418, 4294901760
    %420 = vmatpush.msra.mxu0 %v419
    %v421 = vand.u32 %v61, 4294901760
    %v422 = vsub.f32 %v61, %v421
    %v423 = vand.u32 %v422, 4294901760
    %424 = vmatpush.msra.mxu0 %v423
    %v425 = vand.u32 %v60, 4294901760
    %v426 = vsub.f32 %v60, %v425
    %v427 = vand.u32 %v426, 4294901760
    %428 = vmatpush.msra.mxu0 %v427
    %v429 = vand.u32 %v59, 4294901760
    %v430 = vsub.f32 %v59, %v429
    %v431 = vand.u32 %v430, 4294901760
    %432 = vmatpush.msra.mxu0 %v431
    %v433 = vand.u32 %v58, 4294901760
    %v434 = vsub.f32 %v58, %v433
    %v435 = vand.u32 %v434, 4294901760
    %436 = vmatpush.msra.mxu0 %v435
    %v437 = vand.u32 %v57, 4294901760
    %v438 = vsub.f32 %v57, %v437
    %v439 = vand.u32 %v438, 4294901760
    %440 = vmatpush.msra.mxu0 %v439
    %v441 = vand.u32 %v53, 4294901760
    %442 = vmatmul.f32.gmra.mxu0 %v441
    %v443 = vpop.f32.mrf.mxu0
    %v444 = vadd.f32 %v357, %v443
    %v445 = vand.u32 %v54, 4294901760
    %446 = vmatmul.f32.gmra.mxu0 %v445
    %v447 = vpop.f32.mrf.mxu0
    %v448 = vadd.f32 %v363, %v447
    %v449 = vand.u32 %v55, 4294901760
    %450 = vmatmul.f32.gmra.mxu0 %v449
    %v451 = vpop.f32.mrf.mxu0
    %v452 = vadd.f32 %v369, %v451
    %v453 = vand.u32 %v56, 4294901760
    %454 = vmatmul.f32.gmra.mxu0 %v453
    %v455 = vpop.f32.mrf.mxu0
    %v456 = vadd.f32 %v375, %v455
    %457 = vdwg.mxu0
    %v458 = vand.u32 %v72, 4294901760
    %459 = vmatpush.msra.mxu0 %v458
    %v460 = vand.u32 %v71, 4294901760
    %461 = vmatpush.msra.mxu0 %v460
    %v462 = vand.u32 %v70, 4294901760
    %463 = vmatpush.msra.mxu0 %v462
    %v464 = vand.u32 %v69, 4294901760
    %465 = vmatpush.msra.mxu0 %v464
    %v466 = vand.u32 %v68, 4294901760
    %467 = vmatpush.msra.mxu0 %v466
    %v468 = vand.u32 %v67, 4294901760
    %469 = vmatpush.msra.mxu0 %v468
    %v470 = vand.u32 %v66, 4294901760
    %471 = vmatpush.msra.mxu0 %v470
    %v472 = vand.u32 %v65, 4294901760
    %473 = vmatpush.msra.mxu0 %v472
    %v474 = vand.u32 %v64, 4294901760
    %475 = vmatpush.msra.mxu0 %v474
    %v476 = vand.u32 %v63, 4294901760
    %477 = vmatpush.msra.mxu0 %v476
    %v478 = vand.u32 %v62, 4294901760
    %479 = vmatpush.msra.mxu0 %v478
    %v480 = vand.u32 %v61, 4294901760
    %481 = vmatpush.msra.mxu0 %v480
    %v482 = vand.u32 %v60, 4294901760
    %483 = vmatpush.msra.mxu0 %v482
    %v484 = vand.u32 %v59, 4294901760
    %485 = vmatpush.msra.mxu0 %v484
    %v486 = vand.u32 %v58, 4294901760
    %487 = vmatpush.msra.mxu0 %v486
    %v488 = vand.u32 %v57, 4294901760
    %489 = vmatpush.msra.mxu0 %v488
    %v490 = vand.u32 %v53, 4294901760
    %491 = vmatmul.f32.gmra.mxu0 %v490
    %v492 = vpop.f32.mrf.mxu0
    %v493 = vadd.f32 %v444, %v492
    %v494 = vand.u32 %v54, 4294901760
    %495 = vmatmul.f32.gmra.mxu0 %v494
    %v496 = vpop.f32.mrf.mxu0
    %v497 = vadd.f32 %v448, %v496
    %v498 = vand.u32 %v55, 4294901760
    %499 = vmatmul.f32.gmra.mxu0 %v498
    %v500 = vpop.f32.mrf.mxu0
    %v501 = vadd.f32 %v452, %v500
    %v502 = vand.u32 %v56, 4294901760
    %503 = vmatmul.f32.gmra.mxu0 %v502
    %v504 = vpop.f32.mrf.mxu0
    %v505 = vadd.f32 %v456, %v504
    %506 = vdwg.mxu0
    %507 = vst [vmem:[%s2] sm:$0xff] %v493
    %508 = vst [vmem:[%s2 + $0x8] sm:$0xff] %v497
    %509 = vst [vmem:[%s2 + $0x10] sm:$0xff] %v501
    %510 = vst [vmem:[%s2 + $0x18] sm:$0xff] %v505
    // Predicated region
    $region14: #{_partitioned_embedding_forward.1} parent=1 // pred_check
      _
    $region15: #{_partitioned_embedding_forward.1} parent=1 // pred_check_branch
      %512 = sbr.rel (0) target = $region17
    $region16: #{_partitioned_embedding_forward.1} parent=1 // pred_region
      _
    $region17: #{_partitioned_embedding_forward.1} parent=1 // pred_fallthru
      _
    // Predicated region
    $region18: #{_partitioned_embedding_forward.1} parent=1 // pred_check
      _
    $region19: #{_partitioned_embedding_forward.1} parent=1 // pred_check_branch
      %514 = sbr.rel (0) target = $region21
    $region20: #{_partitioned_embedding_forward.1} parent=1 // pred_region
      _
    $region21: #{_partitioned_embedding_forward.1} parent=1 // pred_fallthru
      _
    %515 = vsyncpa [#allocation3], 1

</llo_original>
